<compile_context>
chip_gen: v6e
topology: v6e:2x2x1
jax: 0.10.0
libtpu: 0.0.40
codegen_flags: <defaults>
</compile_context>

<pallas_src>
import functools

import jax
import jax.numpy as jnp
from jax.experimental import pallas as pl
from jax.experimental.pallas import tpu as pltpu


LANE = 128                      # channel (lane) padding granularity
SUBLANE = 8                     # node (sublane) padding granularity
DEFAULT_TILE = 512              # A_hat row / K tile (multiple of 128)
X_RESIDENT_BYTES = 8 * 1024 * 1024   # keep X/H fully VMEM-resident below this
# 32 MiB is safe on every generation (v7x scoped VMEM); v5e/v6e could raise it
# toward 64-96 MiB to allow residency / larger tiles at bigger N.
VMEM_LIMIT = 32 * 1024 * 1024


def _round_up(x, m):
    return (x + m - 1) // m * m


def _pad2(x, rows, cols):
    return jnp.pad(x, ((0, rows - x.shape[0]), (0, cols - x.shape[1])))


# ----------------------------- Pallas kernel ---------------------------------
def _gcn_layer_kernel(a_ref, x_ref, w_ref, b_ref, o_ref, acc_ref,
                      *, relu, tk, x_resident):
    """Fused GCN layer tile: acc += A_tile @ X_ktile over K (f32 accumulator);
    finalize: out = act(acc @ W + b)."""
    k = pl.program_id(1)

    @pl.when(k == 0)
    def _init():
        acc_ref[...] = jnp.zeros_like(acc_ref)

    if x_resident:
        # X is the full (n_p, C) array, resident in VMEM across the whole grid.
        off = pl.multiple_of(k * tk, tk)
        x_blk = x_ref[pl.ds(off, tk), :]
    else:
        # Streamed (tk, C) K-tile.
        x_blk = x_ref[...]

    acc_ref[...] += jnp.dot(a_ref[...], x_blk,
                            preferred_element_type=jnp.float32)

    @pl.when(k == pl.num_programs(1) - 1)
    def _finalize():
        # Keep the accumulator in f32; up-cast W (once per row tile, cheap).
        y = jnp.dot(acc_ref[...], w_ref[...].astype(jnp.float32),
                    preferred_element_type=jnp.float32)
        y = y + b_ref[...]
        if relu:
            y = jnp.maximum(y, 0.0)
        o_ref[...] = y.astype(o_ref.dtype)


# ----------------------------- Pallas wrapper --------------------------------
def _gcn_layer(a, x, w, b, *, tm, tk, relu):
    """One GCN layer: act((A @ X) @ W + b), tiled over (rows, K)."""
    n_p = a.shape[0]
    cin_p = x.shape[1]
    cout_p = w.shape[1]
    grid = (n_p // tm, n_p // tk)

    itemsize = jnp.dtype(x.dtype).itemsize
    x_resident = n_p * cin_p * itemsize <= X_RESIDENT_BYTES
    if x_resident:
        x_spec = pl.BlockSpec((n_p, cin_p), lambda i, k: (0, 0))   # fetched once
    else:
        x_spec = pl.BlockSpec((tk, cin_p), lambda i, k: (k, 0))    # streamed

    flops = 2 * n_p * n_p * cin_p + 2 * n_p * cin_p * cout_p
    bytes_accessed = (jnp.dtype(a.dtype).itemsize * n_p * n_p
                      + itemsize * n_p * cin_p
                      + jnp.dtype(w.dtype).itemsize * cin_p * cout_p
                      + 4 * (cout_p + n_p * cout_p))

    return pl.pallas_call(
        functools.partial(_gcn_layer_kernel, relu=relu, tk=tk,
                          x_resident=x_resident),
        out_shape=jax.ShapeDtypeStruct((n_p, cout_p), jnp.float32),
        grid=grid,
        in_specs=[
            pl.BlockSpec((tm, tk), lambda i, k: (i, k)),           # A_hat tile
            x_spec,                                                # X (resident/streamed)
            pl.BlockSpec((cin_p, cout_p), lambda i, k: (0, 0)),    # W resident
            pl.BlockSpec((1, cout_p), lambda i, k: (0, 0)),        # bias resident
        ],
        out_specs=pl.BlockSpec((tm, cout_p), lambda i, k: (i, 0)),
        scratch_shapes=[pltpu.VMEM((tm, cin_p), jnp.float32)],
        compiler_params=pltpu.CompilerParams(
            dimension_semantics=("parallel", "arbitrary"),
            vmem_limit_bytes=VMEM_LIMIT),
        cost_estimate=pl.CostEstimate(flops=flops, transcendentals=0,
                                      bytes_accessed=bytes_accessed),
    )(a, x, w, b)


def _choose_node_tiling(n, tile):
    """Pick (n_padded, tm, tk) so tm, tk divide n_padded, tm is a sublane
    multiple and tk is either a lane multiple or the full extent."""
    if n > tile:
        n_p = _round_up(n, tile)
        return n_p, tile, tile
    # Small / mid-size graph: one K tile (full extent on the lane dim).
    if n >= 256:
        # Keep >=2 row tiles so v7x's two TensorCores both get work.
        n_p = _round_up(n, 2 * SUBLANE)
        return n_p, n_p // 2, n_p
    n_p = _round_up(n, SUBLANE)
    return n_p, n_p, n_p


def gnn_forward_pallas(a_hat, x, w1, b1, w2, b2, *, tile=DEFAULT_TILE,
                       compute_dtype=jnp.float32):
    """Two-layer GCN forward. compute_dtype=jnp.bfloat16 halves the A_hat HBM
    stream and uses the bf16 MXU path (f32 accumulation); the default f32
    matches the strict 1e-4 reference tolerance."""
    n = x.shape[0]
    cin, hid = w1.shape
    out_c = w2.shape[1]

    cin_p = _round_up(cin, LANE)
    hid_p = _round_up(hid, LANE)
    out_p = _round_up(out_c, LANE)

    n_p, tm, tk = _choose_node_tiling(n, tile)

    a_p = _pad2(a_hat, n_p, n_p).astype(compute_dtype)
    x_p = _pad2(x, n_p, cin_p).astype(compute_dtype)
    w1_p = _pad2(w1, cin_p, hid_p).astype(compute_dtype)
    b1_p = _pad2(b1, 1, hid_p).astype(jnp.float32)
    w2_p = _pad2(w2, hid_p, out_p).astype(compute_dtype)
    b2_p = _pad2(b2, 1, out_p).astype(jnp.float32)

    # Layer 1: h = relu((A @ X) @ W1 + b1)   (in_channels <= hidden, so the N^2
    # matmul stays on the narrow channel dim; bias+ReLU fused in the epilogue).
    h_p = _gcn_layer(a_p, x_p, w1_p, b1_p, tm=tm, tk=tk, relu=True)

    # Layer 2 fused into the same kernel: y = (A @ H) @ W2 + b2.
    # (After lane padding hid_p == out_p here, so the N^2 matmul width is
    # unchanged; this removes the H@W2 intermediate HBM round-trip.)
    y_p = _gcn_layer(a_p, h_p.astype(compute_dtype), w2_p, b2_p,
                     tm=tm, tk=tk, relu=False)

    return y_p[:n, :out_c]


# ------------------------------- glue (JAX) ----------------------------------
def gcn_norm_dense(edge_index, edge_attr, num_nodes):
    """Dense normalized adjacency: D^{-1/2} (A + I) D^{-1/2}."""
    src = edge_index[0]
    dst = edge_index[1]
    a = jnp.zeros((num_nodes, num_nodes), jnp.float32)
    a = a.at[dst, src].add(edge_attr.astype(jnp.float32))
    a = a + jnp.eye(num_nodes, dtype=jnp.float32)           # self loops, weight 1
    deg = a.sum(axis=1)                                      # weighted in-degree
    dinv = jnp.where(deg > 0, 1.0 / jnp.sqrt(deg), 0.0)
    return dinv[:, None] * a * dinv[None, :]


def gnn_forward_ref(a_hat, x, w1, b1, w2, b2):
    h = jnp.maximum(a_hat @ (x @ w1) + b1, 0.0)
    return a_hat @ (h @ w2) + b2


# --------------------------------- main ---------------------------------------
if __name__ == "__main__":
    key = jax.random.PRNGKey(0)
    k_x, k_ei, k_ea, k_w1, k_b1, k_w2, k_b2 = jax.random.split(key, 7)

    num_nodes = 8
    num_edges = 16
    in_channels, hidden_channels, out_channels = 4, 32, 16

    # Inputs (deterministic).
    x = jax.random.normal(k_x, (num_nodes, in_channels), dtype=jnp.float32)
    edge_index = jax.random.randint(k_ei, (2, num_edges), 0, num_nodes,
                                    dtype=jnp.int32)
    edge_attr = jax.random.uniform(k_ea, (num_edges,), dtype=jnp.float32,
                                   minval=0.1, maxval=1.0)

    # Parameters (deterministic synthetic init; GCNConv: linear weight + bias).
    w1 = jax.random.normal(k_w1, (in_channels, hidden_channels),
                           dtype=jnp.float32) * 0.1
    b1 = jax.random.normal(k_b1, (1, hidden_channels), dtype=jnp.float32) * 0.1
    w2 = jax.random.normal(k_w2, (hidden_channels, out_channels),
                           dtype=jnp.float32) * 0.1
    b2 = jax.random.normal(k_b2, (1, out_channels), dtype=jnp.float32) * 0.1

    a_hat = gcn_norm_dense(edge_index, edge_attr, num_nodes)

    out = gnn_forward_pallas(a_hat, x, w1, b1, w2, b2)
    out = jax.block_until_ready(out)

    ref = gnn_forward_ref(a_hat, x, w1, b1, w2, b2)
    assert out.shape == (num_nodes, out_channels)
    assert jnp.allclose(out, ref, atol=1e-4, rtol=1e-4)

    print("KERNEL_OK")
</pallas_src>

<mosaic_0001>
module attributes {stable_mosaic.version = 11 : i64} {
  func.func @_gcn_layer_kernel(%arg0: i32, %arg1: i32, %arg2: memref<8x8xf32, #tpu.memory_space<vmem>>, %arg3: memref<8x128xf32, #tpu.memory_space<vmem>>, %arg4: memref<128x128xf32, #tpu.memory_space<vmem>>, %arg5: memref<1x128xf32, #tpu.memory_space<vmem>>, %arg6: memref<8x128xf32, #tpu.memory_space<vmem>>, %arg7: memref<8x128xf32, #tpu.memory_space<vmem>>) attributes {dimension_semantics = [#tpu.dimension_semantics<parallel>, #tpu.dimension_semantics<arbitrary>], iteration_bounds = array<i64: 1, 1>, scalar_prefetch = 0 : i64, scratch_operands = 1 : i64, tpu.core_type = #tpu.core_type<tc>, window_params = [{transform_indices = @transform_0, window_bounds = array<i64: 8, 8>}, {pipeline_mode = #tpu.pipeline_mode<synchronous>, transform_indices = @transform_1, window_bounds = array<i64: 8, 128>}, {pipeline_mode = #tpu.pipeline_mode<synchronous>, transform_indices = @transform_2, window_bounds = array<i64: 128, 128>}, {pipeline_mode = #tpu.pipeline_mode<synchronous>, transform_indices = @transform_3, window_bounds = array<i64: 1, 128>}, {transform_indices = @transform_4, window_bounds = array<i64: 8, 128>}]} {
    %c0_i32 = arith.constant 0 : i32
    %0 = arith.cmpi eq, %arg1, %c0_i32 : i32
    %1 = arith.extui %0 : i1 to i32
    %c0_i32_0 = arith.constant 0 : i32
    %2 = arith.cmpi ne, %1, %c0_i32_0 : i32
    scf.if %2 {
      %cst_9 = arith.constant 0.000000e+00 : f32
      %15 = vector.broadcast %cst_9 : f32 to vector<8x128xf32>
      %c0_10 = arith.constant 0 : index
      %c0_11 = arith.constant 0 : index
      %16 = vector.load %arg7[%c0_10, %c0_11] : memref<8x128xf32, #tpu.memory_space<vmem>>, vector<8x128xf32>
      tpu.vector_store %arg7[%c0_10, %c0_11], %15 {strides = array<i32>} : memref<8x128xf32, #tpu.memory_space<vmem>>, vector<8x128xf32>,
    } else {
    }
    %c8_i32 = arith.constant 8 : i32
    %3 = arith.muli %arg1, %c8_i32 : i32
    %4 = tpu.assume_multiple %3, 8 : i32
    %5 = arith.index_cast %4 : i32 to index
    %c0 = arith.constant 0 : index
    %6 = vector.load %arg3[%5, %c0] : memref<8x128xf32, #tpu.memory_space<vmem>>, vector<8x128xf32>
    %c0_1 = arith.constant 0 : index
    %c0_2 = arith.constant 0 : index
    %7 = vector.load %arg7[%c0_1, %c0_2] : memref<8x128xf32, #tpu.memory_space<vmem>>, vector<8x128xf32>
    %c0_3 = arith.constant 0 : index
    %c0_4 = arith.constant 0 : index
    %8 = vector.load %arg2[%c0_3, %c0_4] : memref<8x8xf32, #tpu.memory_space<vmem>>, vector<8x8xf32>
    %cst = arith.constant dense<0.000000e+00> : vector<8x128xf32>
    %9 = tpu.matmul %8, %6, %cst {dimension_numbers = #tpu.dot_dimension_numbers<[1], [0], [0], [1], [0, 0, 1, 1], [], []>} : vector<8x8xf32>, vector<8x128xf32>, vector<8x128xf32> -> vector<8x128xf32>
    %10 = arith.addf %7, %9 : vector<8x128xf32>
    %c0_5 = arith.constant 0 : index
    %c0_6 = arith.constant 0 : index
    %11 = vector.load %arg7[%c0_5, %c0_6] : memref<8x128xf32, #tpu.memory_space<vmem>>, vector<8x128xf32>
    tpu.vector_store %arg7[%c0_5, %c0_6], %10 {strides = array<i32>} : memref<8x128xf32, #tpu.memory_space<vmem>>, vector<8x128xf32>,
    %c0_i32_7 = arith.constant 0 : i32
    %12 = arith.cmpi eq, %arg1, %c0_i32_7 : i32
    %13 = arith.extui %12 : i1 to i32
    %c0_i32_8 = arith.constant 0 : i32
    %14 = arith.cmpi ne, %13, %c0_i32_8 : i32
    scf.if %14 {
      %c0_9 = arith.constant 0 : index
      %c0_10 = arith.constant 0 : index
      %15 = vector.load %arg7[%c0_9, %c0_10] : memref<8x128xf32, #tpu.memory_space<vmem>>, vector<8x128xf32>
      %c0_11 = arith.constant 0 : index
      %c0_12 = arith.constant 0 : index
      %16 = vector.load %arg4[%c0_11, %c0_12] : memref<128x128xf32, #tpu.memory_space<vmem>>, vector<128x128xf32>
      %cst_13 = arith.constant dense<0.000000e+00> : vector<8x128xf32>
      %17 = tpu.matmul %15, %16, %cst_13 {dimension_numbers = #tpu.dot_dimension_numbers<[1], [0], [0], [1], [0, 0, 1, 1], [], []>} : vector<8x128xf32>, vector<128x128xf32>, vector<8x128xf32> -> vector<8x128xf32>
      %c0_14 = arith.constant 0 : index
      %c0_15 = arith.constant 0 : index
      %18 = vector.load %arg5[%c0_14, %c0_15] : memref<1x128xf32, #tpu.memory_space<vmem>>, vector<1x128xf32>
      %19 = vector.broadcast %18 : vector<1x128xf32> to vector<8x128xf32>
      %20 = arith.addf %17, %19 : vector<8x128xf32>
      %cst_16 = arith.constant 0.000000e+00 : f32
      %21 = vector.broadcast %cst_16 : f32 to vector<8x128xf32>
      %22 = arith.maximumf %20, %21 : vector<8x128xf32>
      %c0_17 = arith.constant 0 : index
      %c0_18 = arith.constant 0 : index
      %23 = vector.load %arg6[%c0_17, %c0_18] : memref<8x128xf32, #tpu.memory_space<vmem>>, vector<8x128xf32>
      tpu.vector_store %arg6[%c0_17, %c0_18], %22 {strides = array<i32>} : memref<8x128xf32, #tpu.memory_space<vmem>>, vector<8x128xf32>,
    } else {
    }
    return
  }
  func.func @transform_0(%arg0: i32, %arg1: i32) -> (i32, i32) {
    %c0_i32 = arith.constant 0 : i32
    return %arg0, %arg1 : i32, i32
  }
  func.func @transform_1(%arg0: i32, %arg1: i32) -> (i32, i32) {
    %c0_i32 = arith.constant 0 : i32
    %c0_i32_0 = arith.constant 0 : i32
    %c0_i32_1 = arith.constant 0 : i32
    return %c0_i32, %c0_i32_0 : i32, i32
  }
  func.func @transform_2(%arg0: i32, %arg1: i32) -> (i32, i32) {
    %c0_i32 = arith.constant 0 : i32
    %c0_i32_0 = arith.constant 0 : i32
    %c0_i32_1 = arith.constant 0 : i32
    return %c0_i32, %c0_i32_0 : i32, i32
  }
  func.func @transform_3(%arg0: i32, %arg1: i32) -> (i32, i32) {
    %c0_i32 = arith.constant 0 : i32
    %c0_i32_0 = arith.constant 0 : i32
    %c0_i32_1 = arith.constant 0 : i32
    return %c0_i32, %c0_i32_0 : i32, i32
  }
  func.func @transform_4(%arg0: i32, %arg1: i32) -> (i32, i32) {
    %c0_i32 = arith.constant 0 : i32
    %c0_i32_0 = arith.constant 0 : i32
    return %arg0, %c0_i32 : i32, i32
  }
}

</mosaic_0001>

<llo_original>
// kernel: tpu_custom_call.1
$region0: #{tpu_custom_call.1}
  #allocation0 [shape = 'u32[]', space=smem, size = 0x4, offset = 0x4, fixed_abs, tag = 'smem constant byte address 0x4 - core index']
  #allocation1 [shape = 'u32[144,128]{1,0:T(1,128)}', space=vmem, size = 0x12000, scoped, tag = 'internal scratch']
  #allocation2 [shape = 'f32[8,128]{1,0:T(8,128)}', space=vmem, size = 0x1000, scoped, tag = 'scratch operand']
  %s0 = inlined_call_operand.hbm [shape: f32[8,8], index: 0, kind: input, shape index: {}]
  %s1 = inlined_call_operand.hbm [shape: f32[8,128], index: 1, kind: input, shape index: {}]
  %s2 = inlined_call_operand.hbm [shape: f32[128,128], index: 2, kind: input, shape index: {}]
  %s3 = inlined_call_operand.vmem [shape: f32[1,128], index: 3, kind: input, shape index: {}]
  %s4 = inlined_call_operand.hbm [shape: f32[8,128], index: 4, kind: output, shape index: {}]
  %s5 = sld [smem:[#allocation0]]
  $region46: #{tpu_custom_call.1} parent=0
    _
  %s7 = ssub.s32 1, %s5
  %s8 = scalar_select 0, %s7, %s5
  $region1: #{tpu_custom_call.1} parent=0
    #allocation3 [shape = 'u8[4096]{0}', space=vmem, size = 0x1000, scoped, tag = 'input window, operand 0, single buffered']
    #allocation4 [shape = 's32[1]{0}', space=sflag, size = 0x4, scoped, tag = 'scoped memory for tpu_custom_call.1']
    #allocation5 [shape = 's32[1]{0}', space=sflag, size = 0x4, scoped, tag = 'scoped memory for tpu_custom_call.1']
    #allocation6 [shape = 'u8[4096]{0}', space=vmem, size = 0x1000, scoped, tag = 'input window, operand 1, single buffered']
    #allocation7 [shape = 's32[1]{0}', space=sflag, size = 0x4, scoped, tag = 'scoped memory for tpu_custom_call.1']
    #allocation8 [shape = 'u8[65536]{0}', space=vmem, size = 0x10000, scoped, tag = 'input window, operand 2, single buffered']
    #allocation9 [shape = 'u8[4096]{0}', space=vmem, size = 0x1000, scoped, tag = 'output window, operand 0, single buffered']
    %9 = vsyncpa [#allocation4], 0
    %10 = vsyncpa [#allocation7], 0
    %11 = vsyncpa [#allocation5], 0
    // Predicated region
    $region2: #{tpu_custom_call.1} parent=1 // pred_check
      _
    $region3: #{tpu_custom_call.1} parent=1 // pred_check_branch
      %13 = sbr.rel (0) target = $region5
    $region4: #{tpu_custom_call.1} parent=1 // pred_region
      %s15 = ssub.s32 128, 128
      %16 = vsyncadd [#allocation4], %s15
      %s18 = sshll.u32 [#allocation3], 4
      %s19 = int_to_ptr.vmem [resolvable:$true] %s18
      %21 = dma.hbm_to_vmem [thread:$0]  %s0, 128, %s19, [#allocation4]
    $region5: #{tpu_custom_call.1} parent=1 // pred_fallthru
      _
    // Predicated region
    $region6: #{tpu_custom_call.1} parent=1 // pred_check
      _
    $region7: #{tpu_custom_call.1} parent=1 // pred_check_branch
      %23 = sbr.rel (0) target = $region9
    $region8: #{tpu_custom_call.1} parent=1 // pred_region
      %s25 = ssub.s32 128, 128
      %26 = vsyncadd [#allocation7], %s25
      %s28 = sshll.u32 [#allocation6], 4
      %s29 = int_to_ptr.vmem [resolvable:$true] %s28
      %31 = dma.hbm_to_vmem [thread:$0]  %s1, 128, %s29, [#allocation7]
    $region9: #{tpu_custom_call.1} parent=1 // pred_fallthru
      _
    // Predicated region
    $region10: #{tpu_custom_call.1} parent=1 // pred_check
      _
    $region11: #{tpu_custom_call.1} parent=1 // pred_check_branch
      %33 = sbr.rel (0) target = $region13
    $region12: #{tpu_custom_call.1} parent=1 // pred_region
      %s35 = ssub.s32 2048, 2048
      %36 = vsyncadd [#allocation7], %s35
      %s37 = sshll.u32 [#allocation8], 4
      %s38 = int_to_ptr.vmem [resolvable:$true] %s37
      %43 = dma.hbm_to_vmem [thread:$0]  %s2, 2048, %s38, [#allocation7], 128, 128, 8
    $region13: #{tpu_custom_call.1} parent=1 // pred_fallthru
      _
    // Predicated region
    $region14: #{tpu_custom_call.1} parent=1 // pred_check
      _
    $region15: #{tpu_custom_call.1} parent=1 // pred_check_branch
      %45 = sbr.rel (0) target = $region17
    $region16: #{tpu_custom_call.1} parent=1 // pred_region
      _
    $region17: #{tpu_custom_call.1} parent=1 // pred_fallthru
      _
    // Predicated region
    $region18: #{tpu_custom_call.1} parent=1 // pred_check
      _
    $region19: #{tpu_custom_call.1} parent=1 // pred_check_branch
      %47 = sbr.rel (0) target = $region21
    $region20: #{tpu_custom_call.1} parent=1 // pred_region
      %48 = dma.done [#allocation4], 128
    $region21: #{tpu_custom_call.1} parent=1 // pred_fallthru
      _
    // Predicated region
    $region22: #{tpu_custom_call.1} parent=1 // pred_check
      _
    $region23: #{tpu_custom_call.1} parent=1 // pred_check_branch
      %50 = sbr.rel (0) target = $region25
    $region24: #{tpu_custom_call.1} parent=1 // pred_region
      %51 = dma.done [#allocation7], 128
    $region25: #{tpu_custom_call.1} parent=1 // pred_fallthru
      _
    // Predicated region
    $region26: #{tpu_custom_call.1} parent=1 // pred_check
      _
    $region27: #{tpu_custom_call.1} parent=1 // pred_check_branch
      %53 = sbr.rel (0) target = $region29
    $region28: #{tpu_custom_call.1} parent=1 // pred_region
      %54 = dma.done [#allocation7], 2048
    $region29: #{tpu_custom_call.1} parent=1 // pred_fallthru
      _
    %p55 = scmp.eq.s32.totalorder 0, 0
    // Predicated region
    $region30: #{tpu_custom_call.1} parent=1 // pred_check
      %p56 = pneg %p55
    $region31: #{tpu_custom_call.1} parent=1 // pred_check_branch
      %58 = sbr.rel (%p56) target = $region33
    $region32: #{tpu_custom_call.1} parent=1 // pred_region
      %59 = vst [vmem:[#allocation2] sm:$0xff] 0.0
    $region33: #{tpu_custom_call.1} parent=1 // pred_fallthru
      _
    %s60 = smul.u32 0, 8
    %s61 = scalar_lea.vmem [#allocation6], %s60
    %v62 = vld [vmem:[%s61] sm:$0xff]
    %v63 = vld [vmem:[#allocation2] sm:$0xff]
    %v64 = vld [vmem:[#allocation3] sm:$0xff]
    %vm65 = vcmask 64512
    %v67 = vsel %vm65, %v64, 0
    %69 = vmatprep.subr.mxu0 0.0
    %70 = vmatpush1.msra.mxu0 0.0
    %71 = vmatprep.subr.mxu0 0.0
    %72 = vmatpush1.msra.mxu0 0.0
    %73 = vmatprep.subr.mxu0 0.0
    %74 = vmatpush1.msra.mxu0 0.0
    %75 = vmatprep.subr.mxu0 0.0
    %76 = vmatpush1.msra.mxu0 0.0
    %77 = vmatprep.subr.mxu0 0.0
    %78 = vmatpush1.msra.mxu0 0.0
    %79 = vmatprep.subr.mxu0 0.0
    %80 = vmatpush1.msra.mxu0 0.0
    %81 = vmatprep.subr.mxu0 0.0
    %82 = vmatpush1.msra.mxu0 0.0
    %83 = vmatprep.subr.mxu0 0.0
    %84 = vmatpush1.msra.mxu0 0.0
    %85 = vmatprep.subr.mxu0 0.0
    %86 = vmatpush1.msra.mxu0 0.0
    %87 = vmatprep.subr.mxu0 0.0
    %88 = vmatpush1.msra.mxu0 0.0
    %89 = vmatprep.subr.mxu0 0.0
    %90 = vmatpush1.msra.mxu0 0.0
    %91 = vmatprep.subr.mxu0 0.0
    %92 = vmatpush1.msra.mxu0 0.0
    %93 = vmatprep.subr.mxu0 0.0
    %94 = vmatpush1.msra.mxu0 0.0
    %95 = vmatprep.subr.mxu0 0.0
    %96 = vmatpush1.msra.mxu0 0.0
    %97 = vmatprep.subr.mxu0 0.0
    %98 = vmatpush1.msra.mxu0 0.0
    %99 = vmatprep.subr.mxu0 0.0
    %100 = vmatpush1.msra.mxu0 %v62
    %101 = vmatprep.subr.mxu0 0.0
    %102 = vmatpush2.msra.mxu0 0.0
    %103 = vmatprep.subr.mxu0 0.0
    %104 = vmatpush2.msra.mxu0 0.0
    %105 = vmatprep.subr.mxu0 0.0
    %106 = vmatpush2.msra.mxu0 0.0
    %107 = vmatprep.subr.mxu0 0.0
    %108 = vmatpush2.msra.mxu0 0.0
    %109 = vmatprep.subr.mxu0 0.0
    %110 = vmatpush2.msra.mxu0 0.0
    %111 = vmatprep.subr.mxu0 0.0
    %112 = vmatpush2.msra.mxu0 0.0
    %113 = vmatprep.subr.mxu0 0.0
    %114 = vmatpush2.msra.mxu0 0.0
    %115 = vmatprep.subr.mxu0 0.0
    %116 = vmatpush2.msra.mxu0 0.0
    %117 = vmatprep.subr.mxu0 0.0
    %118 = vmatpush2.msra.mxu0 0.0
    %119 = vmatprep.subr.mxu0 0.0
    %120 = vmatpush2.msra.mxu0 0.0
    %121 = vmatprep.subr.mxu0 0.0
    %122 = vmatpush2.msra.mxu0 0.0
    %123 = vmatprep.subr.mxu0 0.0
    %124 = vmatpush2.msra.mxu0 0.0
    %125 = vmatprep.subr.mxu0 0.0
    %126 = vmatpush2.msra.mxu0 0.0
    %127 = vmatprep.subr.mxu0 0.0
    %128 = vmatpush2.msra.mxu0 0.0
    %129 = vmatprep.subr.mxu0 0.0
    %130 = vmatpush2.msra.mxu0 0.0
    %131 = vmatprep.subr.mxu0 0.0
    %132 = vmatpush2.msra.mxu0 0.0
    %133 = vmatprep.mubr.f32.mxu0 0.0
    %134 = vmatmul.mubr.f32.gmra.mxu0 %v67
    %v135 = vpop.f32.mrf.mxu0
    %v136 = vadd.f32 0.0, %v135
    %v137 = vpop.f32.mrf.mxu0
    %138 = vdwg.mxu0
    %v139 = vadd.f32 %v63, %v136
    %140 = vst [vmem:[#allocation2] sm:$0xff] %v139
    // Predicated region
    $region34: #{tpu_custom_call.1} parent=1 // pred_check
      %p141 = pneg %p55
    $region35: #{tpu_custom_call.1} parent=1 // pred_check_branch
      %143 = sbr.rel (%p141) target = $region37
    $region36: #{tpu_custom_call.1} parent=1 // pred_region
      %v144 = vld [vmem:[#allocation2] sm:$0xff]
      %v145 = vld [vmem:[#allocation8] sm:$0xff]
      %v146 = vld [vmem:[#allocation8 + $0x8] sm:$0xff]
      %v147 = vld [vmem:[#allocation8 + $0x10] sm:$0xff]
      %v148 = vld [vmem:[#allocation8 + $0x18] sm:$0xff]
      %v149 = vld [vmem:[#allocation8 + $0x20] sm:$0xff]
      %v150 = vld [vmem:[#allocation8 + $0x28] sm:$0xff]
      %v151 = vld [vmem:[#allocation8 + $0x30] sm:$0xff]
      %v152 = vld [vmem:[#allocation8 + $0x38] sm:$0xff]
      %v153 = vld [vmem:[#allocation8 + $0x40] sm:$0xff]
      %v154 = vld [vmem:[#allocation8 + $0x48] sm:$0xff]
      %v155 = vld [vmem:[#allocation8 + $0x50] sm:$0xff]
      %v156 = vld [vmem:[#allocation8 + $0x58] sm:$0xff]
      %v157 = vld [vmem:[#allocation8 + $0x60] sm:$0xff]
      %v158 = vld [vmem:[#allocation8 + $0x68] sm:$0xff]
      %v159 = vld [vmem:[#allocation8 + $0x70] sm:$0xff]
      %v160 = vld [vmem:[#allocation8 + $0x78] sm:$0xff]
      %v161 = vld [vmem:[%s3] sm:$0x1]
      %v163 = vlaneseq
      %v164 = vshrl.u32 %v163, 7
      %v165 = vsub.s32 0, %v164
      %v166 = vrot.slane %v161, %v165
      %168 = vmatprep.subr.mxu0 0.0
      %169 = vmatpush1.msra.mxu0 %v160
      %170 = vmatprep.subr.mxu0 0.0
      %171 = vmatpush1.msra.mxu0 %v159
      %172 = vmatprep.subr.mxu0 0.0
      %173 = vmatpush1.msra.mxu0 %v158
      %174 = vmatprep.subr.mxu0 0.0
      %175 = vmatpush1.msra.mxu0 %v157
      %176 = vmatprep.subr.mxu0 0.0
      %177 = vmatpush1.msra.mxu0 %v156
      %178 = vmatprep.subr.mxu0 0.0
      %179 = vmatpush1.msra.mxu0 %v155
      %180 = vmatprep.subr.mxu0 0.0
      %181 = vmatpush1.msra.mxu0 %v154
      %182 = vmatprep.subr.mxu0 0.0
      %183 = vmatpush1.msra.mxu0 %v153
      %184 = vmatprep.subr.mxu0 0.0
      %185 = vmatpush1.msra.mxu0 %v152
      %186 = vmatprep.subr.mxu0 0.0
      %187 = vmatpush1.msra.mxu0 %v151
      %188 = vmatprep.subr.mxu0 0.0
      %189 = vmatpush1.msra.mxu0 %v150
      %190 = vmatprep.subr.mxu0 0.0
      %191 = vmatpush1.msra.mxu0 %v149
      %192 = vmatprep.subr.mxu0 0.0
      %193 = vmatpush1.msra.mxu0 %v148
      %194 = vmatprep.subr.mxu0 0.0
      %195 = vmatpush1.msra.mxu0 %v147
      %196 = vmatprep.subr.mxu0 0.0
      %197 = vmatpush1.msra.mxu0 %v146
      %198 = vmatprep.subr.mxu0 0.0
      %199 = vmatpush1.msra.mxu0 %v145
      %200 = vmatprep.subr.mxu0 0.0
      %201 = vmatpush2.msra.mxu0 0.0
      %202 = vmatprep.subr.mxu0 0.0
      %203 = vmatpush2.msra.mxu0 0.0
      %204 = vmatprep.subr.mxu0 0.0
      %205 = vmatpush2.msra.mxu0 0.0
      %206 = vmatprep.subr.mxu0 0.0
      %207 = vmatpush2.msra.mxu0 0.0
      %208 = vmatprep.subr.mxu0 0.0
      %209 = vmatpush2.msra.mxu0 0.0
      %210 = vmatprep.subr.mxu0 0.0
      %211 = vmatpush2.msra.mxu0 0.0
      %212 = vmatprep.subr.mxu0 0.0
      %213 = vmatpush2.msra.mxu0 0.0
      %214 = vmatprep.subr.mxu0 0.0
      %215 = vmatpush2.msra.mxu0 0.0
      %216 = vmatprep.subr.mxu0 0.0
      %217 = vmatpush2.msra.mxu0 0.0
      %218 = vmatprep.subr.mxu0 0.0
      %219 = vmatpush2.msra.mxu0 0.0
      %220 = vmatprep.subr.mxu0 0.0
      %221 = vmatpush2.msra.mxu0 0.0
      %222 = vmatprep.subr.mxu0 0.0
      %223 = vmatpush2.msra.mxu0 0.0
      %224 = vmatprep.subr.mxu0 0.0
      %225 = vmatpush2.msra.mxu0 0.0
      %226 = vmatprep.subr.mxu0 0.0
      %227 = vmatpush2.msra.mxu0 0.0
      %228 = vmatprep.subr.mxu0 0.0
      %229 = vmatpush2.msra.mxu0 0.0
      %230 = vmatprep.subr.mxu0 0.0
      %231 = vmatpush2.msra.mxu0 0.0
      %232 = vmatprep.mubr.f32.mxu0 0.0
      %233 = vmatmul.mubr.f32.gmra.mxu0 %v144
      %v234 = vpop.f32.mrf.mxu0
      %v235 = vadd.f32 %v166, %v234
      %v236 = vpop.f32.mrf.mxu0
      %237 = vdwg.mxu0
      %v238 = vmax.f32 %v235, 0.0
      %239 = vst [vmem:[#allocation9] sm:$0xff] %v238
    $region37: #{tpu_custom_call.1} parent=1 // pred_fallthru
      _
    // Predicated region
    $region38: #{tpu_custom_call.1} parent=1 // pred_check
      _
    $region39: #{tpu_custom_call.1} parent=1 // pred_check_branch
      %241 = sbr.rel (0) target = $region41
    $region40: #{tpu_custom_call.1} parent=1 // pred_region
      %s243 = ssub.s32 128, 128
      %244 = vsyncadd [#allocation5], %s243
      %s246 = sshll.u32 [#allocation9], 4
      %s247 = int_to_ptr.vmem [resolvable:$true] %s246
      %249 = dma.vmem_to_hbm [thread:$0]  %s247, 128, %s4, [#allocation5]
    $region41: #{tpu_custom_call.1} parent=1 // pred_fallthru
      _
    // Predicated region
    $region42: #{tpu_custom_call.1} parent=1 // pred_check
      _
    $region43: #{tpu_custom_call.1} parent=1 // pred_check_branch
      %251 = sbr.rel (0) target = $region45
    $region44: #{tpu_custom_call.1} parent=1 // pred_region
      %252 = dma.done [#allocation5], 128
    $region45: #{tpu_custom_call.1} parent=1 // pred_fallthru
      _
    %253 = vsyncpa [#allocation4], 1
    %254 = vsyncpa [#allocation7], 1
    %255 = vsyncpa [#allocation5], 1

</llo_original>
